<compile_context>
chip_gen: v6e
topology: v6e:2x2x1
jax: 0.10.0
libtpu: 0.0.40
codegen_flags: <defaults>
</compile_context>

<pallas_src>
import jax
import jax.numpy as jnp
from jax.experimental import pallas as pl
from jax.experimental.pallas import tpu as pltpu


def conv1x1_relu_kernel(x_ref, w_ref, b_ref, o_ref):
    # x_ref: (Nb, C_in, T)  w_ref: (C_out, C_in)  b_ref: (C_out, 1)  o_ref: (Nb, C_out, T)
    x = x_ref[...]
    w = w_ref[...]
    c_in = w_ref.shape[1]

    # VPU broadcast-FMAs over the tiny static channel contraction; bias folded
    # into the first term so we never do a separate full-tile bias pass.
    acc = w[None, :, 0:1] * x[:, 0:1, :] + b_ref[...][None, :, :]
    for ci in range(1, c_in):                       # static, tiny unroll
        acc = acc + w[None, :, ci:ci + 1] * x[:, ci:ci + 1, :]

    o_ref[...] = jnp.maximum(acc, 0.0).astype(o_ref.dtype)


def _round_up(x, m):
    return ((x + m - 1) // m) * m


def _largest_divisor_leq(n, cap):
    cap = max(1, min(cap, n))
    for d in range(cap, 0, -1):
        if n % d == 0:
            return d
    return 1


def conv1x1_relu(x_nchw, weight, bias, out_dtype=None):
    """Conv2d(C_in, C_out, k=1, s=1, p=0) + ReLU.

    x_nchw: (N, C_in, H, W); weight: (C_out, C_in); bias: (C_out,).
    Returns (N, C_out, H, W) in `out_dtype` (default: input dtype)."""
    N, C_in, H, W = x_nchw.shape
    C_out = weight.shape[0]
    HW = H * W
    out_dtype = x_nchw.dtype if out_dtype is None else out_dtype
    itemsize = jnp.dtype(out_dtype).itemsize

    # ---- pixel tiling: lane-dense (multiple of 128) tiles, capped so the
    #      double-buffered per-step working set stays well under the smallest
    #      default scoped-VMEM budget (v5e 16 MiB; v7x 64 MiB physical VMEM).
    T_CAP = 16384                               # 128*128 lanes ≈ 2 MiB f32 out / image / step
    hw128 = _round_up(HW, 128)
    T = min(hw128, T_CAP)
    HWp = _round_up(HW, T)                      # multiple of T and of 128
    n_pix = HWp // T

    # ---- batch blocking: amortize ~0.35 us/step pipeline overhead by targeting
    #      ~2 MiB of output per grid step, but keep total grid length >= 2 so
    #      v7x's two TensorCores both get work (v5e/v6e are single-TC: harmless).
    TARGET_STEP_OUT_BYTES = 2 << 20
    per_image_out_bytes = C_out * T * itemsize
    nb_cap = max(1, TARGET_STEP_OUT_BYTES // per_image_out_bytes)
    if n_pix == 1 and N >= 2:
        nb_cap = min(nb_cap, N // 2)
    Nb = _largest_divisor_leq(N, nb_cap)
    n_batch = N // Nb

    # Contiguous reshape to channel-major pixels (no transpose); pad pixel dim
    # so every store is an unmasked lane-dense vst.
    x3 = x_nchw.reshape(N, C_in, HW)
    if HWp != HW:
        x3 = jnp.pad(x3, ((0, 0), (0, 0), (0, HWp - HW)))
    b_col = bias.reshape(C_out, 1)

    out3 = pl.pallas_call(
        conv1x1_relu_kernel,
        out_shape=jax.ShapeDtypeStruct((N, C_out, HWp), out_dtype),
        grid_spec=pltpu.PrefetchScalarGridSpec(
            num_scalar_prefetch=0,
            grid=(n_batch, n_pix),
            in_specs=[
                pl.BlockSpec((Nb, C_in, T), lambda n, p: (n, 0, p)),
                # weights / bias: tiny, resident across the whole grid
                pl.BlockSpec((C_out, C_in), lambda n, p: (0, 0)),
                pl.BlockSpec((C_out, 1), lambda n, p: (0, 0)),
            ],
            out_specs=pl.BlockSpec((Nb, C_out, T), lambda n, p: (n, 0, p)),
        ),
        compiler_params=pltpu.CompilerParams(
            # no reduction axis: both grid dims are independent
            dimension_semantics=("parallel", "parallel")),
    )(x3, weight, b_col)

    if HWp != HW:
        out3 = out3[:, :, :HW]
    return out3.reshape(N, C_out, H, W)


def init_params(key, c_in=3, c_out=32):
    # Deterministic synthetic init (shapes match nn.Conv2d(3, 32, kernel_size=1)):
    #   weight: (C_out, C_in, 1, 1) -> stored as (C_out, C_in); bias: (C_out,)
    kw, kb = jax.random.split(key)
    fan_in = c_in * 1 * 1
    bound = 1.0 / jnp.sqrt(fan_in)
    weight = jax.random.uniform(kw, (c_out, c_in), jnp.float32, -bound, bound)
    bias = jax.random.uniform(kb, (c_out,), jnp.float32, -bound, bound)
    return weight, bias


if __name__ == "__main__":
    key = jax.random.PRNGKey(0)
    k_x, k_p = jax.random.split(key)

    # Small NCHW input consistent with init_size=3 input channels.
    N, C_in, H, W = 2, 3, 16, 16
    C_out = 32
    x = jax.random.normal(k_x, (N, C_in, H, W), dtype=jnp.float32)
    weight, bias = init_params(k_p, c_in=C_in, c_out=C_out)

    y = conv1x1_relu(x, weight, bias)
    y = jax.block_until_ready(y)

    # Pure-JAX reference of the same math (1x1 conv == channel matmul) + ReLU.
    ref = jnp.einsum('oc,nchw->nohw', weight, x) + bias[None, :, None, None]
    ref = jnp.maximum(ref, 0.0)

    assert y.shape == (N, C_out, H, W)
    assert jnp.allclose(y, ref, atol=1e-5, rtol=1e-5)

    print("KERNEL_OK")
</pallas_src>

<mosaic_0001>
module attributes {stable_mosaic.version = 11 : i64} {
  func.func @conv1x1_relu_kernel(%arg0: i32, %arg1: i32, %arg2: memref<1x3x256xf32, #tpu.memory_space<vmem>>, %arg3: memref<32x3xf32, #tpu.memory_space<vmem>>, %arg4: memref<32x1xf32, #tpu.memory_space<vmem>>, %arg5: memref<1x32x256xf32, #tpu.memory_space<vmem>>) attributes {dimension_semantics = [#tpu.dimension_semantics<parallel>, #tpu.dimension_semantics<parallel>], iteration_bounds = array<i64: 2, 1>, scalar_prefetch = 0 : i64, scratch_operands = 0 : i64, tpu.core_type = #tpu.core_type<tc>, window_params = [{transform_indices = @transform_0, window_bounds = array<i64: 1, 3, 256>}, {pipeline_mode = #tpu.pipeline_mode<synchronous>, transform_indices = @transform_1, window_bounds = array<i64: 32, 3>}, {pipeline_mode = #tpu.pipeline_mode<synchronous>, transform_indices = @transform_2, window_bounds = array<i64: 32, 1>}, {transform_indices = @transform_3, window_bounds = array<i64: 1, 32, 256>}]} {
    %c0 = arith.constant 0 : index
    %c0_0 = arith.constant 0 : index
    %c0_1 = arith.constant 0 : index
    %0 = vector.load %arg2[%c0, %c0_0, %c0_1] : memref<1x3x256xf32, #tpu.memory_space<vmem>>, vector<1x3x256xf32>
    %c0_2 = arith.constant 0 : index
    %c0_3 = arith.constant 0 : index
    %1 = vector.load %arg3[%c0_2, %c0_3] : memref<32x3xf32, #tpu.memory_space<vmem>>, vector<32x3xf32>
    %2 = vector.extract_strided_slice %1 {offsets = [0, 0], sizes = [32, 1], strides = [1, 1]} : vector<32x3xf32> to vector<32x1xf32>
    %3 = vector.shape_cast %2 : vector<32x1xf32> to vector<1x32x1xf32>
    %4 = vector.extract_strided_slice %0 {offsets = [0, 0, 0], sizes = [1, 1, 256], strides = [1, 1, 1]} : vector<1x3x256xf32> to vector<1x1x256xf32>
    %5 = vector.broadcast %3 : vector<1x32x1xf32> to vector<1x32x256xf32>
    %6 = vector.broadcast %4 : vector<1x1x256xf32> to vector<1x32x256xf32>
    %7 = arith.mulf %5, %6 : vector<1x32x256xf32>
    %c0_4 = arith.constant 0 : index
    %c0_5 = arith.constant 0 : index
    %8 = vector.load %arg4[%c0_4, %c0_5] : memref<32x1xf32, #tpu.memory_space<vmem>>, vector<32x1xf32>
    %9 = vector.shape_cast %8 : vector<32x1xf32> to vector<1x32x1xf32>
    %10 = vector.broadcast %9 : vector<1x32x1xf32> to vector<1x32x256xf32>
    %11 = arith.addf %7, %10 : vector<1x32x256xf32>
    %12 = vector.extract_strided_slice %1 {offsets = [0, 1], sizes = [32, 1], strides = [1, 1]} : vector<32x3xf32> to vector<32x1xf32>
    %13 = vector.shape_cast %12 : vector<32x1xf32> to vector<1x32x1xf32>
    %14 = vector.extract_strided_slice %0 {offsets = [0, 1, 0], sizes = [1, 1, 256], strides = [1, 1, 1]} : vector<1x3x256xf32> to vector<1x1x256xf32>
    %15 = vector.broadcast %13 : vector<1x32x1xf32> to vector<1x32x256xf32>
    %16 = vector.broadcast %14 : vector<1x1x256xf32> to vector<1x32x256xf32>
    %17 = arith.mulf %15, %16 : vector<1x32x256xf32>
    %18 = arith.addf %11, %17 : vector<1x32x256xf32>
    %19 = vector.extract_strided_slice %1 {offsets = [0, 2], sizes = [32, 1], strides = [1, 1]} : vector<32x3xf32> to vector<32x1xf32>
    %20 = vector.shape_cast %19 : vector<32x1xf32> to vector<1x32x1xf32>
    %21 = vector.extract_strided_slice %0 {offsets = [0, 2, 0], sizes = [1, 1, 256], strides = [1, 1, 1]} : vector<1x3x256xf32> to vector<1x1x256xf32>
    %22 = vector.broadcast %20 : vector<1x32x1xf32> to vector<1x32x256xf32>
    %23 = vector.broadcast %21 : vector<1x1x256xf32> to vector<1x32x256xf32>
    %24 = arith.mulf %22, %23 : vector<1x32x256xf32>
    %25 = arith.addf %18, %24 : vector<1x32x256xf32>
    %cst = arith.constant 0.000000e+00 : f32
    %26 = vector.broadcast %cst : f32 to vector<1x32x256xf32>
    %27 = arith.maximumf %25, %26 : vector<1x32x256xf32>
    %c0_6 = arith.constant 0 : index
    %c0_7 = arith.constant 0 : index
    %c0_8 = arith.constant 0 : index
    %28 = vector.load %arg5[%c0_6, %c0_7, %c0_8] : memref<1x32x256xf32, #tpu.memory_space<vmem>>, vector<1x32x256xf32>
    tpu.vector_store %arg5[%c0_6, %c0_7, %c0_8], %27 {strides = array<i32>} : memref<1x32x256xf32, #tpu.memory_space<vmem>>, vector<1x32x256xf32>,
    return
  }
  func.func @transform_0(%arg0: i32, %arg1: i32) -> (i32, i32, i32) {
    %c0_i32 = arith.constant 0 : i32
    %c0_i32_0 = arith.constant 0 : i32
    return %arg0, %c0_i32, %arg1 : i32, i32, i32
  }
  func.func @transform_1(%arg0: i32, %arg1: i32) -> (i32, i32) {
    %c0_i32 = arith.constant 0 : i32
    %c0_i32_0 = arith.constant 0 : i32
    %c0_i32_1 = arith.constant 0 : i32
    return %c0_i32, %c0_i32_0 : i32, i32
  }
  func.func @transform_2(%arg0: i32, %arg1: i32) -> (i32, i32) {
    %c0_i32 = arith.constant 0 : i32
    %c0_i32_0 = arith.constant 0 : i32
    %c0_i32_1 = arith.constant 0 : i32
    return %c0_i32, %c0_i32_0 : i32, i32
  }
  func.func @transform_3(%arg0: i32, %arg1: i32) -> (i32, i32, i32) {
    %c0_i32 = arith.constant 0 : i32
    %c0_i32_0 = arith.constant 0 : i32
    return %arg0, %c0_i32, %arg1 : i32, i32, i32
  }
}

</mosaic_0001>

<llo_original>
// kernel: tpu_custom_call.1
$region0: #{tpu_custom_call.1}
  #allocation0 [shape = 'u32[]', space=smem, size = 0x4, offset = 0x4, fixed_abs, tag = 'smem constant byte address 0x4 - core index']
  #allocation1 [shape = 'u32[144,128]{1,0:T(1,128)}', space=vmem, size = 0x12000, scoped, tag = 'internal scratch']
  %s0 = inlined_call_operand.vmem [shape: f32[2,3,256], index: 0, kind: input, shape index: {}]
  %s1 = inlined_call_operand.vmem [shape: f32[32,3], index: 1, kind: input, shape index: {}]
  %s2 = inlined_call_operand.vmem [shape: f32[32,1], index: 2, kind: input, shape index: {}]
  %s3 = inlined_call_operand.hbm [shape: f32[2,32,256], index: 3, kind: output, shape index: {}]
  %s4 = sld [smem:[#allocation0]]
  $region45: #{tpu_custom_call.1} parent=0
    _
  %s6 = ssub.s32 1, %s4
  %s7 = scalar_select 0, %s6, %s4
  $region1: #{tpu_custom_call.1} parent=0
    #allocation2 [shape = 'u8[65536]{0}', space=vmem, size = 0x10000, scoped, tag = 'output window, operand 0']
    #allocation3 [shape = 's32[2]{0}', space=sflag, size = 0x8, scoped, tag = 'scoped memory for tpu_custom_call.1']
    %8 = vsyncpa [#allocation3], 0
    %s9 = scalar_lea.sflag [#allocation3], 1
    %10 = vsyncpa %s9, 0
    loop: start=0, step=1, limit=4
    $region2: #{tpu_custom_call.1} parent=1 // loop_pre_header
      _
    $region3: #{tpu_custom_call.1} parent=1 // loop_header
      %s12 = sphi 0, %s16
      %p13 = scmp.ge.s32.totalorder %s12, 4
      %s19 = sphi 0, %s31
      %s20 = sphi 0, %s27
      %s21 = sphi 0, %s19
      %s22 = sphi 0, %s20
      %s23 = sphi 0, %s21
      %s24 = sphi 0, %s22
      %s36 = sphi 0, %s38
      %s39 = sphi 0, %s36
      %s40 = sphi 0, %s39
      %s56 = sphi 0, %s40
      %s60 = sphi 0, %s60
      %s62 = sphi 0, %s60
      %s63 = sphi 0, %s62
      %s77 = sphi 0, %s63
      %s81 = sphi 0, %s81
      %s83 = sphi 0, %s81
      %s84 = sphi 0, %s83
      %s98 = sphi 0, %s84
      %s106 = sphi 0, %s108
      %s109 = sphi 0, %s106
      %s110 = sphi 0, %s109
      %s126 = sphi 0, %s110
    $region4: #{tpu_custom_call.1} parent=1 // loop_header_branch
      %15 = sbr.rel (%p13) target = $region8
    $region5: #{tpu_custom_call.1} parent=1 // loop_body
      %s17 = ssub.s32 %s12, 1
      %s18 = ssub.s32 %s12, 2
      %s25 = sadd.s32 1, %s20
      %p26 = scmp.ge.s32.totalorder %s25, 1
      %s27 = scalar_select %p26, 0, %s25
      %s28 = sadd.s32 1, %s19
      %s29 = scalar_select %p26, %s28, %s19
      %p30 = scmp.ge.s32.totalorder %s29, 2
      %s31 = scalar_select %p30, 0, %s29
      %s32 = ssub.s32 %s19, %s31
      %s33 = ssub.s32 %s20, %s27
      %s34 = sor.u32 %s32, %s33
      %p35 = scmp.eq.s32.totalorder %s34, 0
      %s37 = sadd.s32 %s36, 1
      %s38 = scalar_select %p35, %s36, %s37
      %p41 = pneg %p35
      %p42 = scmp.eq.s32.totalorder %s12, 1
      %p43 = por %p41, %p42
      %p44 = scmp.ne.s32.totalorder %s36, %s39
      %p45 = scmp.eq.s32.totalorder %s12, 0
      %p46 = por %p44, %p45
      %p47 = scmp.ne.s32.totalorder %s36, %s39
      %p48 = scmp.eq.s32.totalorder %s17, 1
      %p49 = por %p47, %p48
      %p50 = scmp.ne.s32.totalorder %s39, %s40
      %p51 = scmp.eq.s32.totalorder %s17, 0
      %p52 = por %p50, %p51
      %p53 = scmp.ne.s32.totalorder %s39, %s40
      %p54 = scmp.eq.s32.totalorder %s18, 1
      %p55 = por %p53, %p54
      %p57 = scmp.ne.s32.totalorder %s40, %s56
      %p58 = scmp.eq.s32.totalorder %s18, 0
      %p59 = por %p57, %p58
      %s61 = sadd.s32 %s60, 1
      %p64 = scmp.eq.s32.totalorder %s12, 1
      %p65 = scmp.ne.s32.totalorder %s60, %s62
      %p66 = scmp.eq.s32.totalorder %s12, 0
      %p67 = por %p65, %p66
      %p68 = scmp.ne.s32.totalorder %s60, %s62
      %p69 = scmp.eq.s32.totalorder %s17, 1
      %p70 = por %p68, %p69
      %p71 = scmp.ne.s32.totalorder %s62, %s63
      %p72 = scmp.eq.s32.totalorder %s17, 0
      %p73 = por %p71, %p72
      %p74 = scmp.ne.s32.totalorder %s62, %s63
      %p75 = scmp.eq.s32.totalorder %s18, 1
      %p76 = por %p74, %p75
      %p78 = scmp.ne.s32.totalorder %s63, %s77
      %p79 = scmp.eq.s32.totalorder %s18, 0
      %p80 = por %p78, %p79
      %s82 = sadd.s32 %s81, 1
      %p85 = scmp.eq.s32.totalorder %s12, 1
      %p86 = scmp.ne.s32.totalorder %s81, %s83
      %p87 = scmp.eq.s32.totalorder %s12, 0
      %p88 = por %p86, %p87
      %p89 = scmp.ne.s32.totalorder %s81, %s83
      %p90 = scmp.eq.s32.totalorder %s17, 1
      %p91 = por %p89, %p90
      %p92 = scmp.ne.s32.totalorder %s83, %s84
      %p93 = scmp.eq.s32.totalorder %s17, 0
      %p94 = por %p92, %p93
      %p95 = scmp.ne.s32.totalorder %s83, %s84
      %p96 = scmp.eq.s32.totalorder %s18, 1
      %p97 = por %p95, %p96
      %p99 = scmp.ne.s32.totalorder %s84, %s98
      %p100 = scmp.eq.s32.totalorder %s18, 0
      %p101 = por %p99, %p100
      %s102 = ssub.s32 %s19, %s31
      %s103 = ssub.s32 %s20, %s27
      %s104 = sor.u32 %s102, %s103
      %p105 = scmp.eq.s32.totalorder %s104, 0
      %s107 = sadd.s32 %s106, 1
      %s108 = scalar_select %p105, %s106, %s107
      %p111 = pneg %p105
      %p112 = scmp.eq.s32.totalorder %s12, 1
      %p113 = por %p111, %p112
      %p114 = scmp.ne.s32.totalorder %s106, %s109
      %p115 = scmp.eq.s32.totalorder %s12, 0
      %p116 = por %p114, %p115
      %p117 = scmp.ne.s32.totalorder %s106, %s109
      %p118 = scmp.eq.s32.totalorder %s17, 1
      %p119 = por %p117, %p118
      %p120 = scmp.ne.s32.totalorder %s109, %s110
      %p121 = scmp.eq.s32.totalorder %s17, 0
      %p122 = por %p120, %p121
      %p123 = scmp.ne.s32.totalorder %s109, %s110
      %p124 = scmp.eq.s32.totalorder %s18, 1
      %p125 = por %p123, %p124
      %p127 = scmp.ne.s32.totalorder %s110, %s126
      %p128 = scmp.eq.s32.totalorder %s18, 0
      %p129 = por %p127, %p128
      %p130 = scmp.le.s32.totalorder 1, %s12
      %p131 = scmp.lt.s32.totalorder %s12, 3
      %p132 = pnand %p130, %p131
      %p133 = pneg %p132
      // Predicated region
      $region9: #{tpu_custom_call.1} parent=5 // pred_check
        _
      $region10: #{tpu_custom_call.1} parent=5 // pred_check_branch
        %135 = sbr.rel (%p132) target = $region12
      $region11: #{tpu_custom_call.1} parent=5 // pred_region
        %s136 = ssub.s32 %s12, 1
        // Predicated region
        $region13: #{tpu_custom_call.1} parent=11 // pred_check
          %p137 = pneg %p73
        $region14: #{tpu_custom_call.1} parent=11 // pred_check_branch
          %139 = sbr.rel (%p137) target = $region16
        $region15: #{tpu_custom_call.1} parent=11 // pred_region
          _
        $region16: #{tpu_custom_call.1} parent=11 // pred_fallthru
          _
        // Predicated region
        $region17: #{tpu_custom_call.1} parent=11 // pred_check
          %p140 = pneg %p94
        $region18: #{tpu_custom_call.1} parent=11 // pred_check_branch
          %142 = sbr.rel (%p140) target = $region20
        $region19: #{tpu_custom_call.1} parent=11 // pred_region
          _
        $region20: #{tpu_custom_call.1} parent=11 // pred_fallthru
          _
      $region12: #{tpu_custom_call.1} parent=5 // pred_fallthru
        _
      %p143 = scmp.lt.s32.totalorder %s12, 2
      // Predicated region
      $region21: #{tpu_custom_call.1} parent=5 // pred_check
        %p144 = pneg %p143
      $region22: #{tpu_custom_call.1} parent=5 // pred_check_branch
        %146 = sbr.rel (%p144) target = $region24
      $region23: #{tpu_custom_call.1} parent=5 // pred_region
        // Predicated region
        $region25: #{tpu_custom_call.1} parent=23 // pred_check
          %p147 = pneg %p46
        $region26: #{tpu_custom_call.1} parent=23 // pred_check_branch
          %149 = sbr.rel (%p147) target = $region28
        $region27: #{tpu_custom_call.1} parent=23 // pred_region
          %s150 = smul.u32 2, %s20
          %p151 = scmp.lt.s32.totalorder %s19, 1
          %s152 = scalar_select %p151, %s19, 1
          %p153 = scmp.lt.s32.totalorder %s150, 1
          %s154 = scalar_select %p153, %s150, 1
          %s155 = smul.addr %s152, 2
          %s156 = sadd.s32 %s154, %s155
          %s157 = smul.addr %s156, 4
          %s158 = scalar_lea.vmem %s0, %s157
          %s159 = smul.u32 2, %s20
        $region28: #{tpu_custom_call.1} parent=23 // pred_fallthru
          _
      $region24: #{tpu_custom_call.1} parent=5 // pred_fallthru
        _
      %p160 = scmp.le.s32.totalorder 1, %s12
      %p161 = scmp.lt.s32.totalorder %s12, 3
      %p162 = pnand %p160, %p161
      %p163 = pneg %p162
      // Predicated region
      $region29: #{tpu_custom_call.1} parent=5 // pred_check
        _
      $region30: #{tpu_custom_call.1} parent=5 // pred_check_branch
        %165 = sbr.rel (%p162) target = $region32
      $region31: #{tpu_custom_call.1} parent=5 // pred_region
        %s166 = ssub.s32 %s12, 1
        %s167 = smul.u32 2, %s22
        %p168 = scmp.lt.s32.totalorder %s21, 1
        %s169 = scalar_select %p168, %s21, 1
        %p170 = scmp.lt.s32.totalorder %s167, 1
        %s171 = scalar_select %p170, %s167, 1
        %s172 = smul.addr %s169, 2
        %s173 = sadd.s32 %s171, %s172
        %s174 = smul.addr %s173, 4
        %s175 = scalar_lea.vmem %s0, %s174
        %p176 = pneg %p52
        %p177 = pneg %p49
        %p178 = pneg %p73
        %p179 = pneg %p70
        %p180 = pneg %p94
        %p181 = pneg %p91
        %p182 = pneg %p122
        %p183 = pneg %p119
        %s184 = sand.u32 %s109, 1
        %s185 = scalar_lea.sflag [#allocation3], %s184
        %s186 = sand.u32 %s109, 1
        %s187 = smul.addr %s186, 64
        %s188 = scalar_lea.vmem [#allocation2], %s187
        %s189 = smul.u32 2, %s22
        %p190 = scmp.lt.s32.totalorder %s21, 1
        %s191 = scalar_select %p190, %s21, 1
        %p192 = scmp.lt.s32.totalorder %s189, 1
        %s193 = scalar_select %p192, %s189, 1
        %s194 = smul.addr %s191, 2
        %s195 = sadd.s32 %s193, %s194
        %s196 = smul.addr %s195, 4
        %s197 = scalar_lea.vmem %s0, %s196
        %s198 = smul.u32 2, %s22
        %s199 = smul.u32 2, %s22
        %v200 = vld [vmem:[%s197] sm:$0x77]
        %v201 = vld [vmem:[%s1] sm:$0xff]
        %v202 = vld [vmem:[%s1 + $0x8] sm:$0xff]
        %v203 = vld [vmem:[%s1 + $0x10] sm:$0xff]
        %v204 = vld [vmem:[%s1 + $0x18] sm:$0xff]
        %206 = vset.pattern.permute.xlu0 0
        %207 = vperm.xlu0 %206, %v201
        %v208 = vpop.permute.xlu0 %207
        %211 = vset.pattern.permute.xlu0 0
        %212 = vperm.xlu0 %211, %v202
        %v213 = vpop.permute.xlu0 %212
        %216 = vset.pattern.permute.xlu0 0
        %217 = vperm.xlu0 %216, %v203
        %v218 = vpop.permute.xlu0 %217
        %221 = vset.pattern.permute.xlu0 0
        %222 = vperm.xlu0 %221, %v204
        %v223 = vpop.permute.xlu0 %222
        %v226 = vlaneseq
        %v227 = vshrl.u32 %v226, 7
        %v228 = vsub.s32 0, %v227
        %v229 = vrot.slane %v200, %v228
        %v230 = vlaneseq
        %v231 = vshrl.u32 %v230, 7
        %v232 = vsub.s32 4, %v231
        %v233 = vrot.slane %v200, %v232
        %v236 = vlaneseq
        %v237 = vshrl.u32 %v236, 7
        %v238 = vsub.s32 0, %v237
        %v239 = vrot.slane %v229, %v238
        %v240 = vlaneseq
        %v241 = vshrl.u32 %v240, 7
        %v242 = vsub.s32 0, %v241
        %v243 = vrot.slane %v233, %v242
        %v244 = vmul.f32 %v208, %v239
        %v245 = vmul.f32 %v208, %v243
        %v246 = vmul.f32 %v213, %v239
        %v247 = vmul.f32 %v213, %v243
        %v248 = vmul.f32 %v218, %v239
        %v249 = vmul.f32 %v218, %v243
        %v250 = vmul.f32 %v223, %v239
        %v251 = vmul.f32 %v223, %v243
        %v252 = vld [vmem:[%s2] sm:$0xff]
        %v253 = vld [vmem:[%s2 + $0x8] sm:$0xff]
        %v254 = vld [vmem:[%s2 + $0x10] sm:$0xff]
        %v255 = vld [vmem:[%s2 + $0x18] sm:$0xff]
        %257 = vset.pattern.permute.xlu0 0
        %258 = vperm.xlu0 %257, %v252
        %v259 = vpop.permute.xlu0 %258
        %262 = vset.pattern.permute.xlu0 0
        %263 = vperm.xlu0 %262, %v253
        %v264 = vpop.permute.xlu0 %263
        %267 = vset.pattern.permute.xlu0 0
        %268 = vperm.xlu0 %267, %v254
        %v269 = vpop.permute.xlu0 %268
        %272 = vset.pattern.permute.xlu0 0
        %273 = vperm.xlu0 %272, %v255
        %v274 = vpop.permute.xlu0 %273
        %v276 = vadd.f32 %v244, %v259
        %v277 = vadd.f32 %v245, %v259
        %v278 = vadd.f32 %v246, %v264
        %v279 = vadd.f32 %v247, %v264
        %v280 = vadd.f32 %v248, %v269
        %v281 = vadd.f32 %v249, %v269
        %v282 = vadd.f32 %v250, %v274
        %v283 = vadd.f32 %v251, %v274
        %284 = vset.pattern.permute.xlu0 1
        %285 = vperm.xlu0 %284, %v201
        %v286 = vpop.permute.xlu0 %285
        %288 = vset.pattern.permute.xlu0 1
        %289 = vperm.xlu0 %288, %v202
        %v290 = vpop.permute.xlu0 %289
        %292 = vset.pattern.permute.xlu0 1
        %293 = vperm.xlu0 %292, %v203
        %v294 = vpop.permute.xlu0 %293
        %296 = vset.pattern.permute.xlu0 1
        %297 = vperm.xlu0 %296, %v204
        %v298 = vpop.permute.xlu0 %297
        %v300 = vlaneseq
        %v301 = vshrl.u32 %v300, 7
        %v302 = vsub.s32 1, %v301
        %v303 = vrot.slane %v200, %v302
        %v304 = vlaneseq
        %v305 = vshrl.u32 %v304, 7
        %v306 = vsub.s32 5, %v305
        %v307 = vrot.slane %v200, %v306
        %v310 = vlaneseq
        %v311 = vshrl.u32 %v310, 7
        %v312 = vsub.s32 1, %v311
        %v313 = vrot.slane %v303, %v312
        %v314 = vlaneseq
        %v315 = vshrl.u32 %v314, 7
        %v316 = vsub.s32 1, %v315
        %v317 = vrot.slane %v307, %v316
        %v318 = vmul.f32 %v286, %v313
        %v319 = vmul.f32 %v286, %v317
        %v320 = vmul.f32 %v290, %v313
        %v321 = vmul.f32 %v290, %v317
        %v322 = vmul.f32 %v294, %v313
        %v323 = vmul.f32 %v294, %v317
        %v324 = vmul.f32 %v298, %v313
        %v325 = vmul.f32 %v298, %v317
        %v326 = vadd.f32 %v276, %v318
        %v327 = vadd.f32 %v277, %v319
        %v328 = vadd.f32 %v278, %v320
        %v329 = vadd.f32 %v279, %v321
        %v330 = vadd.f32 %v280, %v322
        %v331 = vadd.f32 %v281, %v323
        %v332 = vadd.f32 %v282, %v324
        %v333 = vadd.f32 %v283, %v325
        %334 = vset.pattern.permute.xlu0 2
        %335 = vperm.xlu0 %334, %v201
        %v336 = vpop.permute.xlu0 %335
        %338 = vset.pattern.permute.xlu0 2
        %339 = vperm.xlu0 %338, %v202
        %v340 = vpop.permute.xlu0 %339
        %342 = vset.pattern.permute.xlu0 2
        %343 = vperm.xlu0 %342, %v203
        %v344 = vpop.permute.xlu0 %343
        %346 = vset.pattern.permute.xlu0 2
        %347 = vperm.xlu0 %346, %v204
        %v348 = vpop.permute.xlu0 %347
        %v350 = vlaneseq
        %v351 = vshrl.u32 %v350, 7
        %v352 = vsub.s32 2, %v351
        %v353 = vrot.slane %v200, %v352
        %v354 = vlaneseq
        %v355 = vshrl.u32 %v354, 7
        %v356 = vsub.s32 6, %v355
        %v357 = vrot.slane %v200, %v356
        %v360 = vlaneseq
        %v361 = vshrl.u32 %v360, 7
        %v362 = vsub.s32 2, %v361
        %v363 = vrot.slane %v353, %v362
        %v364 = vlaneseq
        %v365 = vshrl.u32 %v364, 7
        %v366 = vsub.s32 2, %v365
        %v367 = vrot.slane %v357, %v366
        %v368 = vmul.f32 %v336, %v363
        %v369 = vmul.f32 %v336, %v367
        %v370 = vmul.f32 %v340, %v363
        %v371 = vmul.f32 %v340, %v367
        %v372 = vmul.f32 %v344, %v363
        %v373 = vmul.f32 %v344, %v367
        %v374 = vmul.f32 %v348, %v363
        %v375 = vmul.f32 %v348, %v367
        %v376 = vadd.f32 %v326, %v368
        %v377 = vadd.f32 %v327, %v369
        %v378 = vadd.f32 %v328, %v370
        %v379 = vadd.f32 %v329, %v371
        %v380 = vadd.f32 %v330, %v372
        %v381 = vadd.f32 %v331, %v373
        %v382 = vadd.f32 %v332, %v374
        %v383 = vadd.f32 %v333, %v375
        %v384 = vmax.f32 %v376, 0.0
        %v385 = vmax.f32 %v377, 0.0
        %v386 = vmax.f32 %v378, 0.0
        %v387 = vmax.f32 %v379, 0.0
        %v388 = vmax.f32 %v380, 0.0
        %v389 = vmax.f32 %v381, 0.0
        %v390 = vmax.f32 %v382, 0.0
        %v391 = vmax.f32 %v383, 0.0
        %392 = vst [vmem:[%s188] sm:$0xff] %v384
        %393 = vst [vmem:[%s188 + $0x8] sm:$0xff] %v385
        %394 = vst [vmem:[%s188 + $0x10] sm:$0xff] %v386
        %395 = vst [vmem:[%s188 + $0x18] sm:$0xff] %v387
        %396 = vst [vmem:[%s188 + $0x20] sm:$0xff] %v388
        %397 = vst [vmem:[%s188 + $0x28] sm:$0xff] %v389
        %398 = vst [vmem:[%s188 + $0x30] sm:$0xff] %v390
        %399 = vst [vmem:[%s188 + $0x38] sm:$0xff] %v391
        %s400 = sand.u32 %s109, 1
        %s401 = scalar_lea.sflag [#allocation3], %s400
        %s402 = sand.u32 %s109, 1
        %s403 = smul.addr %s402, 64
        %s404 = scalar_lea.vmem [#allocation2], %s403
        // Predicated region
        $region33: #{tpu_custom_call.1} parent=31 // pred_check
          %p405 = pneg %p119
        $region34: #{tpu_custom_call.1} parent=31 // pred_check_branch
          %407 = sbr.rel (%p405) target = $region36
        $region35: #{tpu_custom_call.1} parent=31 // pred_region
          %s408 = smul.u32 2, %s22
          %s410 = ssub.s32 1024, 1024
          %411 = vsyncadd %s401, %s410
          %s412 = smul.addr %s21, 8
          %s413 = sadd.s32 %s408, %s412
          %s414 = smul.addr %s413, 128
          %s415 = scalar_lea.hbm %s3, %s414
          %s416 = sshll.u32 %s404, 4
          %s417 = int_to_ptr.vmem [resolvable:$true] %s416
          %422 = dma.vmem_to_hbm [thread:$0]  %s417, 1024, %s415, %s401, 256, 256, 16
        $region36: #{tpu_custom_call.1} parent=31 // pred_fallthru
          _
      $region32: #{tpu_custom_call.1} parent=5 // pred_fallthru
        _
      %p423 = scmp.le.s32.totalorder 2, %s12
      // Predicated region
      $region37: #{tpu_custom_call.1} parent=5 // pred_check
        %p424 = pneg %p423
      $region38: #{tpu_custom_call.1} parent=5 // pred_check_branch
        %426 = sbr.rel (%p424) target = $region40
      $region39: #{tpu_custom_call.1} parent=5 // pred_region
        %s427 = ssub.s32 %s12, 2
        // Predicated region
        $region41: #{tpu_custom_call.1} parent=39 // pred_check
          %p428 = pneg %p125
        $region42: #{tpu_custom_call.1} parent=39 // pred_check_branch
          %430 = sbr.rel (%p428) target = $region44
        $region43: #{tpu_custom_call.1} parent=39 // pred_region
          %s431 = sand.u32 %s110, 1
          %s432 = scalar_lea.sflag [#allocation3], %s431
          %s433 = sand.u32 %s110, 1
          %s434 = smul.addr %s433, 64
          %s435 = scalar_lea.vmem [#allocation2], %s434
          %436 = dma.done %s432, 1024
        $region44: #{tpu_custom_call.1} parent=39 // pred_fallthru
          _
      $region40: #{tpu_custom_call.1} parent=5 // pred_fallthru
        _
    $region6: #{tpu_custom_call.1} parent=1 // loop_footer
      %s16 = sadd.s32 1, %s12
    $region7: #{tpu_custom_call.1} parent=1 // loop_footer_branch
      %11 = sbr.rel target = $region3
    $region8: #{tpu_custom_call.1} parent=1 // loop_exit
      _
    %437 = vsyncpa [#allocation3], 1
    %s438 = scalar_lea.sflag [#allocation3], 1
    %439 = vsyncpa %s438, 1

</llo_original>
